<compile_context>
chip_gen: v5e
topology: v5e:2x2
jax: 0.10.0
libtpu: 0.0.40
codegen_flags: <defaults>
</compile_context>

<pallas_src>
import jax
import jax.numpy as jnp
from jax.experimental import pallas as pl
from jax.experimental.pallas import tpu as pltpu


def _c_attention_kernel(x_ref, w1t_ref, b1_ref, w2t_ref, b2_ref, o_ref):
    # x_ref:  (Bb, C, L)
    # w1t_ref:(C, Cr)   b1_ref: (1, Cr)
    # w2t_ref:(Cr, C)   b2_ref: (1, C)
    # o_ref:  (Bb, C, L)
    x = x_ref[...].astype(jnp.float32)                     # (Bb, C, L)

    # AdaptiveAvgPool1d(1): mean over L  -> (Bb, C)
    pooled = jnp.mean(x, axis=2)                           # (Bb, C)

    # fc1: (Bb, C) @ (C, Cr).  Cr is tiny -> keep it off the MXU: VPU
    # broadcast-multiply + reduce over C.
    h = jnp.sum(pooled[:, :, None] * w1t_ref[...][None, :, :], axis=1)  # (Bb, Cr)
    h = jnp.maximum(h + b1_ref[...], 0.0)                  # ReLU

    # fc2: (Bb, Cr) @ (Cr, C), same VPU treatment.
    s = jnp.sum(h[:, :, None] * w2t_ref[...][None, :, :], axis=1)       # (Bb, C)
    s = jax.nn.sigmoid(s + b2_ref[...])                    # (Bb, C)

    # x * w  (broadcast the per-channel gate over L) — no transposes needed.
    o_ref[...] = (x * s[:, :, None]).astype(o_ref.dtype)


def _pick_block_b(B, C, L, itemsize, target_tile_bytes):
    """Pick Bb so the (Bb, C, L) tile is multi-MiB but VMEM-safe, and the
    grid keeps >= 2 steps when possible (v7x has 2 TensorCores)."""
    per_b = C * L * itemsize
    bb = max(1, min(B, target_tile_bytes // per_b))
    if B >= 2 and pl.cdiv(B, bb) < 2:
        bb = pl.cdiv(B, 2)
    return int(bb)


def c_attention_block(x, w1, b1, w2, b2, *, target_tile_bytes=4 << 20):
    """x: (B, C, L); w1: (Cr, C); b1: (Cr,); w2: (C, Cr); b2: (C,)."""
    B, C, L = x.shape
    Cr = w1.shape[0]
    itemsize = jnp.dtype(x.dtype).itemsize

    # Pre-transpose weights ONCE in the wrapper (avoid per-step XLU .T).
    w1t = jnp.asarray(w1).T            # (C, Cr)
    w2t = jnp.asarray(w2).T            # (Cr, C)
    b1_2d = jnp.asarray(b1).reshape(1, Cr)
    b2_2d = jnp.asarray(b2).reshape(1, C)

    # TODO(synk): for production shapes with L % 128 != 0, pad L to a lane-dense
    # multiple of 128 (and divide the pooled sum by the true L) to avoid masked
    # vst partial stores; the full-L block here is already correct.

    bb = _pick_block_b(B, C, L, itemsize, target_tile_bytes)
    Bp = pl.cdiv(B, bb) * bb
    xp = x if Bp == B else jnp.pad(x, ((0, Bp - B), (0, 0), (0, 0)))
    grid = (Bp // bb,)

    cost = pl.CostEstimate(
        # mean + broadcast-mul over x dominate; gate matmuls are negligible.
        flops=int(B * (2 * C * L + 4 * C * Cr)),
        transcendentals=int(B * C),                       # sigmoid per channel
        bytes_accessed=int(2 * B * C * L * itemsize
                           + (2 * C * Cr + C + Cr) * 4),
    )

    out = pl.pallas_call(
        _c_attention_kernel,
        out_shape=jax.ShapeDtypeStruct((Bp, C, L), x.dtype),
        grid_spec=pltpu.PrefetchScalarGridSpec(
            num_scalar_prefetch=0,
            grid=grid,
            in_specs=[
                pl.BlockSpec((bb, C, L), lambda b: (b, 0, 0)),
                pl.BlockSpec((C, Cr), lambda b: (0, 0)),
                pl.BlockSpec((1, Cr), lambda b: (0, 0)),
                pl.BlockSpec((Cr, C), lambda b: (0, 0)),
                pl.BlockSpec((1, C), lambda b: (0, 0)),
            ],
            out_specs=pl.BlockSpec((bb, C, L), lambda b: (b, 0, 0)),
        ),
        compiler_params=pltpu.CompilerParams(
            dimension_semantics=("parallel",),
            # 4 x target tile (double-buffered in + out) + tiny weights; safe on
            # v5e (16 MiB scoped default raised), v6e (128 MiB), v7x (64 MiB).
            vmem_limit_bytes=32 * 1024 * 1024,
        ),
        cost_estimate=cost,
    )(xp, w1t, b1_2d, w2t, b2_2d)

    return out if Bp == B else out[:B]


def _reference(x, w1, b1, w2, b2):
    pooled = jnp.mean(x, axis=-1, keepdims=True)                 # (B, C, 1)
    h = jnp.einsum("bcl,oc->bol", pooled, w1) + b1[None, :, None]
    h = jnp.maximum(h, 0.0)
    s = jnp.einsum("bcl,oc->bol", h, w2) + b2[None, :, None]
    s = jax.nn.sigmoid(s)
    return x * s


if __name__ == "__main__":
    B, C, L = 2, 32, 128
    reduction_ratio = 16
    Cr = C // reduction_ratio  # 2

    key = jax.random.PRNGKey(0)
    kx, k1, k2, k3, k4 = jax.random.split(key, 5)

    x = jax.random.normal(kx, (B, C, L), dtype=jnp.float32)
    # Conv1d kernel_size=1 -> 2-D weights.
    w1 = jax.random.normal(k1, (Cr, C), dtype=jnp.float32) * 0.1
    b1 = jax.random.normal(k2, (Cr,), dtype=jnp.float32) * 0.1
    w2 = jax.random.normal(k3, (C, Cr), dtype=jnp.float32) * 0.1
    b2 = jax.random.normal(k4, (C,), dtype=jnp.float32) * 0.1

    out = c_attention_block(x, w1, b1, w2, b2)
    out = jax.block_until_ready(out)

    ref = _reference(x, w1, b1, w2, b2)
    assert out.shape == (B, C, L)
    assert jnp.allclose(out, ref, atol=1e-5, rtol=1e-5)

    print("KERNEL_OK")
</pallas_src>

<mosaic_0001>
module attributes {stable_mosaic.version = 11 : i64} {
  func.func @_c_attention_kernel(%arg0: i32, %arg1: memref<1x32x128xf32, #tpu.memory_space<vmem>>, %arg2: memref<32x2xf32, #tpu.memory_space<vmem>>, %arg3: memref<1x2xf32, #tpu.memory_space<vmem>>, %arg4: memref<2x32xf32, #tpu.memory_space<vmem>>, %arg5: memref<1x32xf32, #tpu.memory_space<vmem>>, %arg6: memref<1x32x128xf32, #tpu.memory_space<vmem>>) attributes {dimension_semantics = [#tpu.dimension_semantics<parallel>], iteration_bounds = array<i64: 2>, scalar_prefetch = 0 : i64, scratch_operands = 0 : i64, tpu.core_type = #tpu.core_type<tc>, window_params = [{transform_indices = @transform_0, window_bounds = array<i64: 1, 32, 128>}, {pipeline_mode = #tpu.pipeline_mode<synchronous>, transform_indices = @transform_1, window_bounds = array<i64: 32, 2>}, {pipeline_mode = #tpu.pipeline_mode<synchronous>, transform_indices = @transform_2, window_bounds = array<i64: 1, 2>}, {pipeline_mode = #tpu.pipeline_mode<synchronous>, transform_indices = @transform_3, window_bounds = array<i64: 2, 32>}, {pipeline_mode = #tpu.pipeline_mode<synchronous>, transform_indices = @transform_4, window_bounds = array<i64: 1, 32>}, {transform_indices = @transform_5, window_bounds = array<i64: 1, 32, 128>}]} {
    %c0 = arith.constant 0 : index
    %c0_0 = arith.constant 0 : index
    %c0_1 = arith.constant 0 : index
    %0 = vector.load %arg1[%c0, %c0_0, %c0_1] : memref<1x32x128xf32, #tpu.memory_space<vmem>>, vector<1x32x128xf32>
    %cst = arith.constant dense<0.000000e+00> : vector<1x32xf32>
    %1 = vector.multi_reduction <add>, %0, %cst [2] : vector<1x32x128xf32> to vector<1x32xf32>
    %cst_2 = arith.constant 1.280000e+02 : f32
    %2 = vector.broadcast %cst_2 : f32 to vector<1x32xf32>
    %3 = arith.divf %1, %2 : vector<1x32xf32>
    %4 = vector.shape_cast %3 : vector<1x32xf32> to vector<1x32x1xf32>
    %c0_3 = arith.constant 0 : index
    %c0_4 = arith.constant 0 : index
    %5 = vector.load %arg2[%c0_3, %c0_4] : memref<32x2xf32, #tpu.memory_space<vmem>>, vector<32x2xf32>
    %6 = vector.shape_cast %5 : vector<32x2xf32> to vector<1x32x2xf32>
    %7 = vector.broadcast %4 : vector<1x32x1xf32> to vector<1x32x2xf32>
    %8 = arith.mulf %7, %6 : vector<1x32x2xf32>
    %cst_5 = arith.constant dense<0.000000e+00> : vector<1x2xf32>
    %9 = vector.multi_reduction <add>, %8, %cst_5 [1] : vector<1x32x2xf32> to vector<1x2xf32>
    %c0_6 = arith.constant 0 : index
    %c0_7 = arith.constant 0 : index
    %10 = vector.load %arg3[%c0_6, %c0_7] : memref<1x2xf32, #tpu.memory_space<vmem>>, vector<1x2xf32>
    %11 = arith.addf %9, %10 : vector<1x2xf32>
    %cst_8 = arith.constant 0.000000e+00 : f32
    %12 = vector.broadcast %cst_8 : f32 to vector<1x2xf32>
    %13 = arith.maximumf %11, %12 : vector<1x2xf32>
    %14 = vector.shape_cast %13 : vector<1x2xf32> to vector<1x2x1xf32>
    %c0_9 = arith.constant 0 : index
    %c0_10 = arith.constant 0 : index
    %15 = vector.load %arg4[%c0_9, %c0_10] : memref<2x32xf32, #tpu.memory_space<vmem>>, vector<2x32xf32>
    %16 = vector.shape_cast %15 : vector<2x32xf32> to vector<1x2x32xf32>
    %17 = vector.broadcast %14 : vector<1x2x1xf32> to vector<1x2x32xf32>
    %18 = arith.mulf %17, %16 : vector<1x2x32xf32>
    %cst_11 = arith.constant dense<0.000000e+00> : vector<1x32xf32>
    %19 = vector.multi_reduction <add>, %18, %cst_11 [1] : vector<1x2x32xf32> to vector<1x32xf32>
    %c0_12 = arith.constant 0 : index
    %c0_13 = arith.constant 0 : index
    %20 = vector.load %arg5[%c0_12, %c0_13] : memref<1x32xf32, #tpu.memory_space<vmem>>, vector<1x32xf32>
    %21 = arith.addf %19, %20 : vector<1x32xf32>
    %22 = arith.negf %21 : vector<1x32xf32>
    %23 = math.exp %22 : vector<1x32xf32>
    %cst_14 = arith.constant 1.000000e+00 : f32
    %24 = vector.broadcast %cst_14 : f32 to vector<1x32xf32>
    %25 = arith.addf %24, %23 : vector<1x32xf32>
    %26 = arith.divf %24, %25 : vector<1x32xf32>
    %27 = vector.shape_cast %26 : vector<1x32xf32> to vector<1x32x1xf32>
    %28 = vector.broadcast %27 : vector<1x32x1xf32> to vector<1x32x128xf32>
    %29 = arith.mulf %0, %28 : vector<1x32x128xf32>
    %c0_15 = arith.constant 0 : index
    %c0_16 = arith.constant 0 : index
    %c0_17 = arith.constant 0 : index
    %30 = vector.load %arg6[%c0_15, %c0_16, %c0_17] : memref<1x32x128xf32, #tpu.memory_space<vmem>>, vector<1x32x128xf32>
    tpu.vector_store %arg6[%c0_15, %c0_16, %c0_17], %29 {strides = array<i32>} : memref<1x32x128xf32, #tpu.memory_space<vmem>>, vector<1x32x128xf32>,
    return
  }
  func.func @transform_0(%arg0: i32) -> (i32, i32, i32) {
    %c0_i32 = arith.constant 0 : i32
    %c0_i32_0 = arith.constant 0 : i32
    %c0_i32_1 = arith.constant 0 : i32
    return %arg0, %c0_i32, %c0_i32_0 : i32, i32, i32
  }
  func.func @transform_1(%arg0: i32) -> (i32, i32) {
    %c0_i32 = arith.constant 0 : i32
    %c0_i32_0 = arith.constant 0 : i32
    %c0_i32_1 = arith.constant 0 : i32
    return %c0_i32, %c0_i32_0 : i32, i32
  }
  func.func @transform_2(%arg0: i32) -> (i32, i32) {
    %c0_i32 = arith.constant 0 : i32
    %c0_i32_0 = arith.constant 0 : i32
    %c0_i32_1 = arith.constant 0 : i32
    return %c0_i32, %c0_i32_0 : i32, i32
  }
  func.func @transform_3(%arg0: i32) -> (i32, i32) {
    %c0_i32 = arith.constant 0 : i32
    %c0_i32_0 = arith.constant 0 : i32
    %c0_i32_1 = arith.constant 0 : i32
    return %c0_i32, %c0_i32_0 : i32, i32
  }
  func.func @transform_4(%arg0: i32) -> (i32, i32) {
    %c0_i32 = arith.constant 0 : i32
    %c0_i32_0 = arith.constant 0 : i32
    %c0_i32_1 = arith.constant 0 : i32
    return %c0_i32, %c0_i32_0 : i32, i32
  }
  func.func @transform_5(%arg0: i32) -> (i32, i32, i32) {
    %c0_i32 = arith.constant 0 : i32
    %c0_i32_0 = arith.constant 0 : i32
    %c0_i32_1 = arith.constant 0 : i32
    return %arg0, %c0_i32, %c0_i32_0 : i32, i32, i32
  }
}

</mosaic_0001>

<llo_original>
// kernel: tpu_custom_call.1
$region0: #{tpu_custom_call.1}
  #allocation0 [shape = 'u32[]', space=smem, size = 0x4, offset = 0x4, fixed_abs, tag = 'smem constant byte address 0x4 - core index']
  #allocation1 [shape = 'u32[72,128]{1,0:T(1,128)}', space=vmem, size = 0x9000, scoped, tag = 'internal scratch']
  %s0 = inlined_call_operand.hbm [shape: f32[2,32,128], index: 0, kind: input, shape index: {}]
  %s1 = inlined_call_operand.vmem [shape: f32[32,2], index: 1, kind: input, shape index: {}]
  %s2 = inlined_call_operand.vmem [shape: f32[1,2], index: 2, kind: input, shape index: {}]
  %s3 = inlined_call_operand.vmem [shape: f32[2,32], index: 3, kind: input, shape index: {}]
  %s4 = inlined_call_operand.vmem [shape: f32[1,32], index: 4, kind: input, shape index: {}]
  %s5 = inlined_call_operand.hbm [shape: f32[2,32,128], index: 5, kind: output, shape index: {}]
  %s6 = sld [smem:[#allocation0]]
  $region57: #{tpu_custom_call.1} parent=0
    _
  %s8 = ssub.s32 1, %s6
  %s9 = scalar_select 0, %s8, %s6
  $region1: #{tpu_custom_call.1} parent=0
    #allocation2 [shape = 'u8[32768]{0}', space=vmem, size = 0x8000, scoped, tag = 'input window, operand 0']
    #allocation3 [shape = 's32[2]{0}', space=sflag, size = 0x8, scoped, tag = 'scoped memory for tpu_custom_call.1']
    #allocation4 [shape = 's32[2]{0}', space=sflag, size = 0x8, scoped, tag = 'scoped memory for tpu_custom_call.1']
    #allocation5 [shape = 'u8[32768]{0}', space=vmem, size = 0x8000, scoped, tag = 'output window, operand 0']
    %10 = vsyncpa [#allocation3], 0
    %s11 = scalar_lea.sflag [#allocation3], 1
    %12 = vsyncpa %s11, 0
    %13 = vsyncpa [#allocation4], 0
    %s14 = scalar_lea.sflag [#allocation4], 1
    %15 = vsyncpa %s14, 0
    loop: start=0, step=1, limit=4
    $region2: #{tpu_custom_call.1} parent=1 // loop_pre_header
      _
    $region3: #{tpu_custom_call.1} parent=1 // loop_header
      %s17 = sphi 0, %s21
      %p18 = scmp.ge.s32.totalorder %s17, 4
      %s27 = sphi 0, %s29
      %s30 = sphi 0, %s27
      %s31 = sphi 0, %s30
      %s47 = sphi 0, %s31
      %s51 = sphi 0, %s51
      %s53 = sphi 0, %s51
      %s54 = sphi 0, %s53
      %s68 = sphi 0, %s54
      %s72 = sphi 0, %s72
      %s74 = sphi 0, %s72
      %s75 = sphi 0, %s74
      %s89 = sphi 0, %s75
      %s93 = sphi 0, %s93
      %s95 = sphi 0, %s93
      %s96 = sphi 0, %s95
      %s110 = sphi 0, %s96
      %s114 = sphi 0, %s114
      %s116 = sphi 0, %s114
      %s117 = sphi 0, %s116
      %s131 = sphi 0, %s117
      %s137 = sphi 0, %s139
      %s140 = sphi 0, %s137
      %s141 = sphi 0, %s140
      %s157 = sphi 0, %s141
    $region4: #{tpu_custom_call.1} parent=1 // loop_header_branch
      %20 = sbr.rel (%p18) target = $region8
    $region5: #{tpu_custom_call.1} parent=1 // loop_body
      %s22 = ssub.s32 %s17, 1
      %s23 = ssub.s32 %s17, 2
      %s24 = sadd.s32 %s17, 1
      %s25 = ssub.s32 %s17, %s24
      %p26 = scmp.eq.s32.totalorder %s25, 0
      %s28 = sadd.s32 %s27, 1
      %s29 = scalar_select %p26, %s27, %s28
      %p32 = pneg %p26
      %p33 = scmp.eq.s32.totalorder %s17, 1
      %p34 = por %p32, %p33
      %p35 = scmp.ne.s32.totalorder %s27, %s30
      %p36 = scmp.eq.s32.totalorder %s17, 0
      %p37 = por %p35, %p36
      %p38 = scmp.ne.s32.totalorder %s27, %s30
      %p39 = scmp.eq.s32.totalorder %s22, 1
      %p40 = por %p38, %p39
      %p41 = scmp.ne.s32.totalorder %s30, %s31
      %p42 = scmp.eq.s32.totalorder %s22, 0
      %p43 = por %p41, %p42
      %p44 = scmp.ne.s32.totalorder %s30, %s31
      %p45 = scmp.eq.s32.totalorder %s23, 1
      %p46 = por %p44, %p45
      %p48 = scmp.ne.s32.totalorder %s31, %s47
      %p49 = scmp.eq.s32.totalorder %s23, 0
      %p50 = por %p48, %p49
      %s52 = sadd.s32 %s51, 1
      %p55 = scmp.eq.s32.totalorder %s17, 1
      %p56 = scmp.ne.s32.totalorder %s51, %s53
      %p57 = scmp.eq.s32.totalorder %s17, 0
      %p58 = por %p56, %p57
      %p59 = scmp.ne.s32.totalorder %s51, %s53
      %p60 = scmp.eq.s32.totalorder %s22, 1
      %p61 = por %p59, %p60
      %p62 = scmp.ne.s32.totalorder %s53, %s54
      %p63 = scmp.eq.s32.totalorder %s22, 0
      %p64 = por %p62, %p63
      %p65 = scmp.ne.s32.totalorder %s53, %s54
      %p66 = scmp.eq.s32.totalorder %s23, 1
      %p67 = por %p65, %p66
      %p69 = scmp.ne.s32.totalorder %s54, %s68
      %p70 = scmp.eq.s32.totalorder %s23, 0
      %p71 = por %p69, %p70
      %s73 = sadd.s32 %s72, 1
      %p76 = scmp.eq.s32.totalorder %s17, 1
      %p77 = scmp.ne.s32.totalorder %s72, %s74
      %p78 = scmp.eq.s32.totalorder %s17, 0
      %p79 = por %p77, %p78
      %p80 = scmp.ne.s32.totalorder %s72, %s74
      %p81 = scmp.eq.s32.totalorder %s22, 1
      %p82 = por %p80, %p81
      %p83 = scmp.ne.s32.totalorder %s74, %s75
      %p84 = scmp.eq.s32.totalorder %s22, 0
      %p85 = por %p83, %p84
      %p86 = scmp.ne.s32.totalorder %s74, %s75
      %p87 = scmp.eq.s32.totalorder %s23, 1
      %p88 = por %p86, %p87
      %p90 = scmp.ne.s32.totalorder %s75, %s89
      %p91 = scmp.eq.s32.totalorder %s23, 0
      %p92 = por %p90, %p91
      %s94 = sadd.s32 %s93, 1
      %p97 = scmp.eq.s32.totalorder %s17, 1
      %p98 = scmp.ne.s32.totalorder %s93, %s95
      %p99 = scmp.eq.s32.totalorder %s17, 0
      %p100 = por %p98, %p99
      %p101 = scmp.ne.s32.totalorder %s93, %s95
      %p102 = scmp.eq.s32.totalorder %s22, 1
      %p103 = por %p101, %p102
      %p104 = scmp.ne.s32.totalorder %s95, %s96
      %p105 = scmp.eq.s32.totalorder %s22, 0
      %p106 = por %p104, %p105
      %p107 = scmp.ne.s32.totalorder %s95, %s96
      %p108 = scmp.eq.s32.totalorder %s23, 1
      %p109 = por %p107, %p108
      %p111 = scmp.ne.s32.totalorder %s96, %s110
      %p112 = scmp.eq.s32.totalorder %s23, 0
      %p113 = por %p111, %p112
      %s115 = sadd.s32 %s114, 1
      %p118 = scmp.eq.s32.totalorder %s17, 1
      %p119 = scmp.ne.s32.totalorder %s114, %s116
      %p120 = scmp.eq.s32.totalorder %s17, 0
      %p121 = por %p119, %p120
      %p122 = scmp.ne.s32.totalorder %s114, %s116
      %p123 = scmp.eq.s32.totalorder %s22, 1
      %p124 = por %p122, %p123
      %p125 = scmp.ne.s32.totalorder %s116, %s117
      %p126 = scmp.eq.s32.totalorder %s22, 0
      %p127 = por %p125, %p126
      %p128 = scmp.ne.s32.totalorder %s116, %s117
      %p129 = scmp.eq.s32.totalorder %s23, 1
      %p130 = por %p128, %p129
      %p132 = scmp.ne.s32.totalorder %s117, %s131
      %p133 = scmp.eq.s32.totalorder %s23, 0
      %p134 = por %p132, %p133
      %s135 = ssub.s32 %s17, %s24
      %p136 = scmp.eq.s32.totalorder %s135, 0
      %s138 = sadd.s32 %s137, 1
      %s139 = scalar_select %p136, %s137, %s138
      %p142 = pneg %p136
      %p143 = scmp.eq.s32.totalorder %s17, 1
      %p144 = por %p142, %p143
      %p145 = scmp.ne.s32.totalorder %s137, %s140
      %p146 = scmp.eq.s32.totalorder %s17, 0
      %p147 = por %p145, %p146
      %p148 = scmp.ne.s32.totalorder %s137, %s140
      %p149 = scmp.eq.s32.totalorder %s22, 1
      %p150 = por %p148, %p149
      %p151 = scmp.ne.s32.totalorder %s140, %s141
      %p152 = scmp.eq.s32.totalorder %s22, 0
      %p153 = por %p151, %p152
      %p154 = scmp.ne.s32.totalorder %s140, %s141
      %p155 = scmp.eq.s32.totalorder %s23, 1
      %p156 = por %p154, %p155
      %p158 = scmp.ne.s32.totalorder %s141, %s157
      %p159 = scmp.eq.s32.totalorder %s23, 0
      %p160 = por %p158, %p159
      %p161 = scmp.le.s32.totalorder 1, %s17
      %p162 = scmp.lt.s32.totalorder %s17, 3
      %p163 = pnand %p161, %p162
      %p164 = pneg %p163
      // Predicated region
      $region9: #{tpu_custom_call.1} parent=5 // pred_check
        _
      $region10: #{tpu_custom_call.1} parent=5 // pred_check_branch
        %166 = sbr.rel (%p163) target = $region12
      $region11: #{tpu_custom_call.1} parent=5 // pred_region
        %s167 = ssub.s32 %s17, 1
        // Predicated region
        $region13: #{tpu_custom_call.1} parent=11 // pred_check
          %p168 = pneg %p64
        $region14: #{tpu_custom_call.1} parent=11 // pred_check_branch
          %170 = sbr.rel (%p168) target = $region16
        $region15: #{tpu_custom_call.1} parent=11 // pred_region
          _
        $region16: #{tpu_custom_call.1} parent=11 // pred_fallthru
          _
        // Predicated region
        $region17: #{tpu_custom_call.1} parent=11 // pred_check
          %p171 = pneg %p85
        $region18: #{tpu_custom_call.1} parent=11 // pred_check_branch
          %173 = sbr.rel (%p171) target = $region20
        $region19: #{tpu_custom_call.1} parent=11 // pred_region
          _
        $region20: #{tpu_custom_call.1} parent=11 // pred_fallthru
          _
        // Predicated region
        $region21: #{tpu_custom_call.1} parent=11 // pred_check
          %p174 = pneg %p106
        $region22: #{tpu_custom_call.1} parent=11 // pred_check_branch
          %176 = sbr.rel (%p174) target = $region24
        $region23: #{tpu_custom_call.1} parent=11 // pred_region
          _
        $region24: #{tpu_custom_call.1} parent=11 // pred_fallthru
          _
        // Predicated region
        $region25: #{tpu_custom_call.1} parent=11 // pred_check
          %p177 = pneg %p127
        $region26: #{tpu_custom_call.1} parent=11 // pred_check_branch
          %179 = sbr.rel (%p177) target = $region28
        $region27: #{tpu_custom_call.1} parent=11 // pred_region
          _
        $region28: #{tpu_custom_call.1} parent=11 // pred_fallthru
          _
      $region12: #{tpu_custom_call.1} parent=5 // pred_fallthru
        _
      %p180 = scmp.lt.s32.totalorder %s17, 2
      // Predicated region
      $region29: #{tpu_custom_call.1} parent=5 // pred_check
        %p181 = pneg %p180
      $region30: #{tpu_custom_call.1} parent=5 // pred_check_branch
        %183 = sbr.rel (%p181) target = $region32
      $region31: #{tpu_custom_call.1} parent=5 // pred_region
        // Predicated region
        $region33: #{tpu_custom_call.1} parent=31 // pred_check
          %p184 = pneg %p37
        $region34: #{tpu_custom_call.1} parent=31 // pred_check_branch
          %186 = sbr.rel (%p184) target = $region36
        $region35: #{tpu_custom_call.1} parent=31 // pred_region
          %s187 = sand.u32 %s27, 1
          %s188 = scalar_lea.sflag [#allocation3], %s187
          %s189 = sand.u32 %s27, 1
          %s190 = smul.addr %s189, 32
          %s191 = scalar_lea.vmem [#allocation2], %s190
          %193 = vsyncadd %s188, 0
          %s194 = smul.addr %s17, 4
          %s195 = smul.addr %s194, 8
          %s196 = scalar_lea.hbm %s0, %s195
          %s197 = sshll.u32 %s196, 4
          %s198 = int_to_ptr.hbm [resolvable:$true] %s197
          %s199 = sshll.u32 %s191, 4
          %s200 = int_to_ptr.vmem [resolvable:$true] %s199
          %205 = dma.hbm_to_vmem [thread:$0]  %s198, 512, %s200, %s188, 128, 128, 8
        $region36: #{tpu_custom_call.1} parent=31 // pred_fallthru
          _
      $region32: #{tpu_custom_call.1} parent=5 // pred_fallthru
        _
      %p206 = scmp.le.s32.totalorder 1, %s17
      %p207 = scmp.lt.s32.totalorder %s17, 3
      %p208 = pnand %p206, %p207
      %p209 = pneg %p208
      // Predicated region
      $region37: #{tpu_custom_call.1} parent=5 // pred_check
        _
      $region38: #{tpu_custom_call.1} parent=5 // pred_check_branch
        %211 = sbr.rel (%p208) target = $region40
      $region39: #{tpu_custom_call.1} parent=5 // pred_region
        %s212 = ssub.s32 %s17, 1
        %s213 = sand.u32 %s30, 1
        %s214 = scalar_lea.sflag [#allocation3], %s213
        %s215 = sand.u32 %s30, 1
        %s216 = smul.addr %s215, 32
        %s217 = scalar_lea.vmem [#allocation2], %s216
        // Predicated region
        $region41: #{tpu_custom_call.1} parent=39 // pred_check
          %p218 = pneg %p43
        $region42: #{tpu_custom_call.1} parent=39 // pred_check_branch
          %220 = sbr.rel (%p218) target = $region44
        $region43: #{tpu_custom_call.1} parent=39 // pred_region
          %222 = dma.done %s214, 512
        $region44: #{tpu_custom_call.1} parent=39 // pred_fallthru
          _
        %s223 = sand.u32 %s30, 1
        %s224 = scalar_lea.sflag [#allocation3], %s223
        %s225 = sand.u32 %s30, 1
        %s226 = smul.addr %s225, 32
        %s227 = scalar_lea.vmem [#allocation2], %s226
        %p228 = pneg %p43
        %p229 = pneg %p40
        %p230 = pneg %p64
        %p231 = pneg %p61
        %p232 = pneg %p85
        %p233 = pneg %p82
        %p234 = pneg %p106
        %p235 = pneg %p103
        %p236 = pneg %p127
        %p237 = pneg %p124
        %p238 = pneg %p153
        %p239 = pneg %p150
        %s240 = sand.u32 %s140, 1
        %s241 = scalar_lea.sflag [#allocation4], %s240
        %s242 = sand.u32 %s140, 1
        %s243 = smul.addr %s242, 32
        %s244 = scalar_lea.vmem [#allocation5], %s243
        %v245 = vld [vmem:[%s217] sm:$0xff]
        %v246 = vld [vmem:[%s217 + $0x8] sm:$0xff]
        %v247 = vld [vmem:[%s217 + $0x10] sm:$0xff]
        %v248 = vld [vmem:[%s217 + $0x18] sm:$0xff]
        %249 = vadd.xlane.f32.xlu0 %v245
        %v250 = vpop.xlane.xlu0 %249
        %251 = vadd.xlane.f32.xlu0 %v246
        %v252 = vpop.xlane.xlu0 %251
        %253 = vadd.xlane.f32.xlu0 %v247
        %v254 = vpop.xlane.xlu0 %253
        %255 = vadd.xlane.f32.xlu0 %v248
        %v256 = vpop.xlane.xlu0 %255
        %v257 = vrcp.pop 128.0
        %v258 = vmul.f32 128.0, %v257
        %v259 = vsub.f32 1.0, %v258
        %v260 = vmul.f32 %v257, %v259
        %v261 = vadd.f32 %v257, %v260
        %vm262 = vweird.f32 %v257
        %v263 = vsel %vm262, %v257, %v261
        %v264 = vmul.f32 %v250, %v263
        %v265 = vmul.f32 %v252, %v263
        %v266 = vmul.f32 %v254, %v263
        %v267 = vmul.f32 %v256, %v263
        %v268 = vld [vmem:[%s1] sm:$0xff]
        %v269 = vld [vmem:[%s1 + $0x8] sm:$0xff]
        %v270 = vld [vmem:[%s1 + $0x10] sm:$0xff]
        %v271 = vld [vmem:[%s1 + $0x18] sm:$0xff]
        %v272 = vmul.f32 %v264, %v268
        %v273 = vmul.f32 %v265, %v269
        %v274 = vmul.f32 %v266, %v270
        %v275 = vmul.f32 %v267, %v271
        %vm276 = vcmask 15360
        %v277 = vsel %vm276, %v272, 0.0
        %v278 = vsel %vm276, %v273, 0.0
        %v279 = vadd.f32 %v277, %v278
        %v280 = vsel %vm276, %v274, 0.0
        %v281 = vadd.f32 %v279, %v280
        %v282 = vsel %vm276, %v275, 0.0
        %v283 = vadd.f32 %v281, %v282
        %v284 = vrot.slane %v283, 4
        %v285 = vadd.f32 %v283, %v284
        %v286 = vrot.slane %v285, 2
        %v287 = vadd.f32 %v285, %v286
        %v288 = vrot.slane %v287, 1
        %v289 = vadd.f32 %v287, %v288
        %v290 = vld [vmem:[%s2] sm:$0x1]
        %v291 = vadd.f32 %v289, %v290
        %v292 = vmax.f32 %v291, 0.0
        %v293 = vperm.slane %v292, 0
        %v294 = vlaneseq
        %v295 = vshrl.u32 %v294, 7
        %297 = vset.pattern.permute.xlu0 %v295
        %298 = vperm.xlu0 %297, %v293
        %v299 = vpop.permute.xlu0 %298
        %v300 = vld [vmem:[%s3] sm:$0x3]
        %v301 = vmul.f32 %v299, %v300
        %vm302 = vcmask 254976
        %v303 = vsel %vm302, %v301, 0.0
        %v304 = vrot.slane %v303, 4
        %v305 = vadd.f32 %v303, %v304
        %v306 = vrot.slane %v305, 2
        %v307 = vadd.f32 %v305, %v306
        %v308 = vrot.slane %v307, 1
        %v309 = vadd.f32 %v307, %v308
        %v310 = vld [vmem:[%s4] sm:$0x1]
        %v311 = vadd.f32 %v309, %v310
        %v312 = vxor.u32 %v311, 2147483648
        %v313 = vmul.f32 %v312, 1.442695
        %v314 = vpow.pop %v313
        %v315 = vadd.f32 %v314, 1.0
        %v316 = vrcp.pop %v315
        %v317 = vmul.f32 %v315, %v316
        %v318 = vsub.f32 1.0, %v317
        %v319 = vmul.f32 %v316, %v318
        %v320 = vadd.f32 %v316, %v319
        %vm321 = vweird.f32 %v315
        %vm322 = vweird.f32 %v316
        %vm323 = vmor %vm321, %vm322
        %v324 = vsel %vm323, %v316, %v320
        %v325 = vand.u32 2147483647, %v315
        %vm326 = vcmp.eq.f32.partialorder %v325, 8.507059e+37
        %v327 = vand.u32 %v315, 2147483648
        %v328 = vor.u32 1.1754944e-38, %v327
        %v329 = vsel %vm326, %v328, %v324
        %v330 = vmul.f32 1.0, %v329
        %v331 = vperm.slane %v330, 0
        %v332 = vlaneseq
        %v333 = vshrl.u32 %v332, 7
        %335 = vset.pattern.permute.xlu0 %v333
        %336 = vperm.xlu0 %335, %v331
        %v337 = vpop.permute.xlu0 %336
        %v338 = vlaneseq
        %v339 = vshrl.u32 %v338, 7
        %v340 = vadd.s32 %v339, 8
        %341 = vset.pattern.permute.xlu0 %v340
        %342 = vperm.xlu0 %341, %v331
        %v343 = vpop.permute.xlu0 %342
        %v344 = vlaneseq
        %v345 = vshrl.u32 %v344, 7
        %v346 = vadd.s32 %v345, 16
        %347 = vset.pattern.permute.xlu0 %v346
        %348 = vperm.xlu0 %347, %v331
        %v349 = vpop.permute.xlu0 %348
        %v350 = vlaneseq
        %v351 = vshrl.u32 %v350, 7
        %v352 = vadd.s32 %v351, 24
        %353 = vset.pattern.permute.xlu0 %v352
        %354 = vperm.xlu0 %353, %v331
        %v355 = vpop.permute.xlu0 %354
        %v356 = vmul.f32 %v245, %v337
        %v357 = vmul.f32 %v246, %v343
        %v358 = vmul.f32 %v247, %v349
        %v359 = vmul.f32 %v248, %v355
        %360 = vst [vmem:[%s244] sm:$0xff] %v356
        %361 = vst [vmem:[%s244 + $0x8] sm:$0xff] %v357
        %362 = vst [vmem:[%s244 + $0x10] sm:$0xff] %v358
        %363 = vst [vmem:[%s244 + $0x18] sm:$0xff] %v359
        %s364 = sand.u32 %s140, 1
        %s365 = scalar_lea.sflag [#allocation4], %s364
        %s366 = sand.u32 %s140, 1
        %s367 = smul.addr %s366, 32
        %s368 = scalar_lea.vmem [#allocation5], %s367
        // Predicated region
        $region45: #{tpu_custom_call.1} parent=39 // pred_check
          %p369 = pneg %p150
        $region46: #{tpu_custom_call.1} parent=39 // pred_check_branch
          %371 = sbr.rel (%p369) target = $region48
        $region47: #{tpu_custom_call.1} parent=39 // pred_region
          %373 = vsyncadd %s365, 0
          %s374 = smul.addr %s22, 4
          %s375 = smul.addr %s374, 8
          %s376 = scalar_lea.hbm %s5, %s375
          %s377 = sshll.u32 %s368, 4
          %s378 = int_to_ptr.vmem [resolvable:$true] %s377
          %s379 = sshll.u32 %s376, 4
          %s380 = int_to_ptr.hbm [resolvable:$true] %s379
          %385 = dma.vmem_to_hbm [thread:$0]  %s378, 512, %s380, %s365, 128, 128, 8
        $region48: #{tpu_custom_call.1} parent=39 // pred_fallthru
          _
      $region40: #{tpu_custom_call.1} parent=5 // pred_fallthru
        _
      %p386 = scmp.le.s32.totalorder 2, %s17
      // Predicated region
      $region49: #{tpu_custom_call.1} parent=5 // pred_check
        %p387 = pneg %p386
      $region50: #{tpu_custom_call.1} parent=5 // pred_check_branch
        %389 = sbr.rel (%p387) target = $region52
      $region51: #{tpu_custom_call.1} parent=5 // pred_region
        %s390 = ssub.s32 %s17, 2
        // Predicated region
        $region53: #{tpu_custom_call.1} parent=51 // pred_check
          %p391 = pneg %p156
        $region54: #{tpu_custom_call.1} parent=51 // pred_check_branch
          %393 = sbr.rel (%p391) target = $region56
        $region55: #{tpu_custom_call.1} parent=51 // pred_region
          %s394 = sand.u32 %s141, 1
          %s395 = scalar_lea.sflag [#allocation4], %s394
          %s396 = sand.u32 %s141, 1
          %s397 = smul.addr %s396, 32
          %s398 = scalar_lea.vmem [#allocation5], %s397
          %400 = dma.done %s395, 512
        $region56: #{tpu_custom_call.1} parent=51 // pred_fallthru
          _
      $region52: #{tpu_custom_call.1} parent=5 // pred_fallthru
        _
    $region6: #{tpu_custom_call.1} parent=1 // loop_footer
      %s21 = sadd.s32 1, %s17
    $region7: #{tpu_custom_call.1} parent=1 // loop_footer_branch
      %16 = sbr.rel target = $region3
    $region8: #{tpu_custom_call.1} parent=1 // loop_exit
      _
    %401 = vsyncpa [#allocation3], 1
    %s402 = scalar_lea.sflag [#allocation3], 1
    %403 = vsyncpa %s402, 1
    %404 = vsyncpa [#allocation4], 1
    %s405 = scalar_lea.sflag [#allocation4], 1
    %406 = vsyncpa %s405, 1

</llo_original>
